<compile_context>
chip_gen: v6e
topology: v6e:2x2x1
jax: 0.10.0
libtpu: 0.0.40
codegen_flags: <defaults>
</compile_context>

<pallas_src>
import math
import functools

import jax
import jax.numpy as jnp
from jax import lax
from jax.experimental import pallas as pl
from jax.experimental.pallas import tpu as pltpu


_VMEM_LIMIT = 48 * 1024 * 1024  # stay well under v7x's 64 MiB physical VMEM


def _pick_tile(dim, target, align):
    """Largest `align`-multiple tile <= target that divides dim, else full dim."""
    if dim <= target:
        return dim
    t = (target // align) * align
    while t >= align:
        if dim % t == 0:
            return t
        t -= align
    return dim


# ----------------------------- Tiled linear (x @ W + b) -----------------------------

def _linear_kernel(x_ref, w_ref, b_ref, o_ref, acc_ref):
    # x: (tm, tk), w: (tk, tn), b: (1, tn), o: (tm, tn), acc: (tm, tn) f32
    @pl.when(pl.program_id(2) == 0)
    def _():
        acc_ref[...] = jnp.zeros_like(acc_ref)

    acc_ref[...] += jnp.dot(x_ref[...], w_ref[...],
                            preferred_element_type=jnp.float32)

    @pl.when(pl.program_id(2) == pl.num_programs(2) - 1)
    def _():
        o_ref[...] = (acc_ref[...] + b_ref[...]).astype(o_ref.dtype)


def _pallas_linear(x, w, b, *, tm_target=256, tn_target=256, tk_target=512):
    M, K = x.shape
    Kw, N = w.shape
    assert K == Kw

    tm = _pick_tile(M, tm_target, 8)     # second-minor of x / o
    tn = _pick_tile(N, tn_target, 128)   # minor of w / b / o
    tk = _pick_tile(K, tk_target, 128)   # minor of x, second-minor of w

    grid = (M // tm, N // tn, K // tk)

    return pl.pallas_call(
        _linear_kernel,
        out_shape=jax.ShapeDtypeStruct((M, N), x.dtype),
        grid_spec=pltpu.PrefetchScalarGridSpec(
            num_scalar_prefetch=0,
            grid=grid,
            in_specs=[
                pl.BlockSpec((tm, tk), lambda i, j, k: (i, k)),
                pl.BlockSpec((tk, tn), lambda i, j, k: (k, j)),
                pl.BlockSpec((1, tn), lambda i, j, k: (0, j)),
            ],
            out_specs=pl.BlockSpec((tm, tn), lambda i, j, k: (i, j)),
            scratch_shapes=[pltpu.VMEM((tm, tn), jnp.float32)],
        ),
        compiler_params=pltpu.CompilerParams(
            dimension_semantics=("parallel", "parallel", "arbitrary"),
            vmem_limit_bytes=_VMEM_LIMIT,
        ),
    )(x, w, b.reshape(1, N))


# ----------------------------- Flash attention -----------------------------

def _flash_attn_kernel(q_ref, k_ref, v_ref, bias_ref, o_ref, m_sc, l_sc, acc_sc):
    # q: (1, tq, Dh) (pre-scaled by 1/sqrt(Dh)), k/v: (1, tk, Dh),
    # bias: (tq, tk) additive bias with causal -1e9 already folded in.
    ki = pl.program_id(2)

    @pl.when(ki == 0)
    def _():
        m_sc[...] = jnp.full_like(m_sc, -jnp.inf)
        l_sc[...] = jnp.zeros_like(l_sc)
        acc_sc[...] = jnp.zeros_like(acc_sc)

    q = q_ref[0]
    k = k_ref[0]
    v = v_ref[0]

    # (tq, tk) scores: contract last dims of q and k (no explicit k transpose).
    s = lax.dot_general(q, k, (((1,), (1,)), ((), ())),
                        preferred_element_type=jnp.float32)
    s = s + bias_ref[...]

    m_prev = m_sc[...]
    m_new = jnp.maximum(m_prev, jnp.max(s, axis=-1, keepdims=True))
    alpha = jnp.exp(m_prev - m_new)
    p = jnp.exp(s - m_new)

    l_sc[...] = alpha * l_sc[...] + jnp.sum(p, axis=-1, keepdims=True)
    acc_sc[...] = alpha * acc_sc[...] + jnp.dot(
        p.astype(v.dtype), v, preferred_element_type=jnp.float32)
    m_sc[...] = m_new

    @pl.when(ki == pl.num_programs(2) - 1)
    def _():
        # Deferred normalization on the (tq, Dh) output, not the (tq, tk) probs.
        o_ref[0] = (acc_sc[...] * pl.reciprocal(l_sc[...])).astype(o_ref.dtype)


def _pallas_attention(qh, kh, vh, masked_bias, *, tq_target=128, tk_target=512):
    # qh/kh/vh: (B*H, S, Dh); q already pre-scaled; masked_bias: (S, S)
    BH, S, Dh = qh.shape

    tq = _pick_tile(S, tq_target, 8)
    tk = _pick_tile(S, tk_target, 128)
    grid = (BH, S // tq, S // tk)

    return pl.pallas_call(
        _flash_attn_kernel,
        out_shape=jax.ShapeDtypeStruct((BH, S, Dh), qh.dtype),
        grid_spec=pltpu.PrefetchScalarGridSpec(
            num_scalar_prefetch=0,
            grid=grid,
            in_specs=[
                pl.BlockSpec((1, tq, Dh), lambda b, qi, ki: (b, qi, 0)),
                pl.BlockSpec((1, tk, Dh), lambda b, qi, ki: (b, ki, 0)),
                pl.BlockSpec((1, tk, Dh), lambda b, qi, ki: (b, ki, 0)),
                pl.BlockSpec((tq, tk), lambda b, qi, ki: (qi, ki)),
            ],
            out_specs=pl.BlockSpec((1, tq, Dh), lambda b, qi, ki: (b, qi, 0)),
            scratch_shapes=[
                pltpu.VMEM((tq, 1), jnp.float32),   # running max
                pltpu.VMEM((tq, 1), jnp.float32),   # running sum
                pltpu.VMEM((tq, Dh), jnp.float32),  # output accumulator
            ],
        ),
        compiler_params=pltpu.CompilerParams(
            dimension_semantics=("parallel", "parallel", "arbitrary"),
            vmem_limit_bytes=_VMEM_LIMIT,
        ),
    )(qh, kh, vh, masked_bias)


# ----------------------------- Module wrapper -----------------------------

def prefill_attention(hidden_states, params, num_heads):
    """Forward pass of PrefillAttention. Returns (output, (cacheKey, cacheValue))."""
    B, S, E = hidden_states.shape
    Dh = E // num_heads

    x2d = hidden_states.reshape(B * S, E)

    # qkv projection (tiled Pallas matmul)
    qkv = _pallas_linear(x2d, params["c_attn_w"], params["c_attn_b"])  # (B*S, 3E)
    q, k, v = jnp.split(qkv, 3, axis=-1)

    cache_key = k.reshape(B, S, E)
    cache_value = v.reshape(B, S, E)

    def to_heads(t):
        return (
            t.reshape(B, S, num_heads, Dh)
            .transpose(0, 2, 1, 3)
            .reshape(B * num_heads, S, Dh)
        )

    # Pre-scale q by 1/sqrt(Dh) on the (S, Dh) tensor (cheaper than scaling (S, S) scores).
    qh = to_heads(q) * jnp.float32(1.0 / math.sqrt(Dh))
    kh, vh = to_heads(k), to_heads(v)

    # Fold the causal mask into the additive bias once (constant per call).
    bias = params["attn_bias"][:S, :S].astype(jnp.float32)
    causal = jnp.tril(jnp.ones((S, S), dtype=bool))
    masked_bias = bias + jnp.where(causal, jnp.float32(0.0), jnp.float32(-1e9))

    ctx = _pallas_attention(qh, kh, vh, masked_bias)  # (B*H, S, Dh)

    ctx = (
        ctx.reshape(B, num_heads, S, Dh)
        .transpose(0, 2, 1, 3)
        .reshape(B * S, E)
    )

    out = _pallas_linear(ctx, params["c_proj_w"], params["c_proj_b"]).reshape(B, S, E)
    # resid_dropout: identity (eval mode)
    return out, (cache_key, cache_value)


# ----------------------------- Pure-JAX reference -----------------------------

def _reference(hidden_states, params, num_heads):
    B, S, E = hidden_states.shape
    Dh = E // num_heads
    x2d = hidden_states.reshape(B * S, E)
    qkv = x2d @ params["c_attn_w"] + params["c_attn_b"]
    q, k, v = jnp.split(qkv, 3, axis=-1)
    cache_key = k.reshape(B, S, E)
    cache_value = v.reshape(B, S, E)
    qh = q.reshape(B, S, num_heads, Dh).transpose(0, 2, 1, 3)
    kh = k.reshape(B, S, num_heads, Dh).transpose(0, 2, 1, 3)
    vh = v.reshape(B, S, num_heads, Dh).transpose(0, 2, 1, 3)
    scores = jnp.einsum("bhqd,bhkd->bhqk", qh, kh) / math.sqrt(Dh)
    scores = scores + params["attn_bias"][:S, :S][None, None]
    mask = jnp.tril(jnp.ones((S, S), dtype=bool))
    scores = jnp.where(mask[None, None], scores, -1e9)
    w = jax.nn.softmax(scores, axis=-1)
    ctx = jnp.einsum("bhqk,bhkd->bhqd", w, vh)
    ctx = ctx.transpose(0, 2, 1, 3).reshape(B * S, E)
    out = (ctx @ params["c_proj_w"] + params["c_proj_b"]).reshape(B, S, E)
    return out, (cache_key, cache_value)


# ----------------------------- Main -----------------------------

if __name__ == "__main__":
    # Small synthetic config: batch=2, seq=8, n_embd=32, num_heads=4, n_ctx=8
    B, S, E, H = 2, 8, 32, 4
    N_CTX = 8
    assert E % H == 0

    key = jax.random.PRNGKey(0)
    k_x, k_caw, k_cab, k_cpw, k_cpb, k_ab = jax.random.split(key, 6)

    hidden = jax.random.normal(k_x, (B, S, E), dtype=jnp.float32)

    params = {
        # c_attn: Linear(E, 3E) — stored (in, out)
        "c_attn_w": 0.02 * jax.random.normal(k_caw, (E, 3 * E), dtype=jnp.float32),
        "c_attn_b": 0.02 * jax.random.normal(k_cab, (3 * E,), dtype=jnp.float32),
        # c_proj: Linear(E, E)
        "c_proj_w": 0.02 * jax.random.normal(k_cpw, (E, E), dtype=jnp.float32),
        "c_proj_b": 0.02 * jax.random.normal(k_cpb, (E,), dtype=jnp.float32),
        # additive attention bias (h.{layer}.attn.bias squeezed) of shape (n_ctx, n_ctx)
        "attn_bias": 0.1 * jax.random.normal(k_ab, (N_CTX, N_CTX), dtype=jnp.float32),
    }

    fwd = jax.jit(functools.partial(prefill_attention, num_heads=H))
    out, (cache_k, cache_v) = fwd(hidden, params)
    jax.block_until_ready(out)
    jax.block_until_ready(cache_k)
    jax.block_until_ready(cache_v)

    ref_out, (ref_k, ref_v) = _reference(hidden, params, H)
    assert jnp.allclose(out, ref_out, atol=1e-5, rtol=1e-5), "output mismatch"
    assert jnp.allclose(cache_k, ref_k, atol=1e-5, rtol=1e-5), "cacheKey mismatch"
    assert jnp.allclose(cache_v, ref_v, atol=1e-5, rtol=1e-5), "cacheValue mismatch"

    print("KERNEL_OK")
</pallas_src>

<mosaic_0001>
module attributes {stable_mosaic.version = 11 : i64} {
  func.func @_linear_kernel(%arg0: i32, %arg1: i32, %arg2: i32, %arg3: memref<16x32xf32, #tpu.memory_space<vmem>>, %arg4: memref<32x96xf32, #tpu.memory_space<vmem>>, %arg5: memref<1x96xf32, #tpu.memory_space<vmem>>, %arg6: memref<16x96xf32, #tpu.memory_space<vmem>>, %arg7: memref<16x96xf32, #tpu.memory_space<vmem>>) attributes {dimension_semantics = [#tpu.dimension_semantics<parallel>, #tpu.dimension_semantics<parallel>, #tpu.dimension_semantics<arbitrary>], iteration_bounds = array<i64: 1, 1, 1>, scalar_prefetch = 0 : i64, scratch_operands = 1 : i64, tpu.core_type = #tpu.core_type<tc>, window_params = [{transform_indices = @transform_0, window_bounds = array<i64: 16, 32>}, {transform_indices = @transform_1, window_bounds = array<i64: 32, 96>}, {transform_indices = @transform_2, window_bounds = array<i64: 1, 96>}, {transform_indices = @transform_3, window_bounds = array<i64: 16, 96>}]} {
    %c0_i32 = arith.constant 0 : i32
    %0 = arith.cmpi eq, %arg2, %c0_i32 : i32
    %1 = arith.extui %0 : i1 to i32
    %c0_i32_0 = arith.constant 0 : i32
    %2 = arith.cmpi ne, %1, %c0_i32_0 : i32
    scf.if %2 {
      %cst_10 = arith.constant 0.000000e+00 : f32
      %12 = vector.broadcast %cst_10 : f32 to vector<16x96xf32>
      %c0_11 = arith.constant 0 : index
      %c0_12 = arith.constant 0 : index
      %13 = vector.load %arg7[%c0_11, %c0_12] : memref<16x96xf32, #tpu.memory_space<vmem>>, vector<16x96xf32>
      tpu.vector_store %arg7[%c0_11, %c0_12], %12 {strides = array<i32>} : memref<16x96xf32, #tpu.memory_space<vmem>>, vector<16x96xf32>,
    } else {
    }
    %c0 = arith.constant 0 : index
    %c0_1 = arith.constant 0 : index
    %3 = vector.load %arg7[%c0, %c0_1] : memref<16x96xf32, #tpu.memory_space<vmem>>, vector<16x96xf32>
    %c0_2 = arith.constant 0 : index
    %c0_3 = arith.constant 0 : index
    %4 = vector.load %arg3[%c0_2, %c0_3] : memref<16x32xf32, #tpu.memory_space<vmem>>, vector<16x32xf32>
    %c0_4 = arith.constant 0 : index
    %c0_5 = arith.constant 0 : index
    %5 = vector.load %arg4[%c0_4, %c0_5] : memref<32x96xf32, #tpu.memory_space<vmem>>, vector<32x96xf32>
    %cst = arith.constant dense<0.000000e+00> : vector<16x96xf32>
    %6 = tpu.matmul %4, %5, %cst {dimension_numbers = #tpu.dot_dimension_numbers<[1], [0], [0], [1], [0, 0, 1, 1], [], []>} : vector<16x32xf32>, vector<32x96xf32>, vector<16x96xf32> -> vector<16x96xf32>
    %7 = arith.addf %3, %6 : vector<16x96xf32>
    %c0_6 = arith.constant 0 : index
    %c0_7 = arith.constant 0 : index
    %8 = vector.load %arg7[%c0_6, %c0_7] : memref<16x96xf32, #tpu.memory_space<vmem>>, vector<16x96xf32>
    tpu.vector_store %arg7[%c0_6, %c0_7], %7 {strides = array<i32>} : memref<16x96xf32, #tpu.memory_space<vmem>>, vector<16x96xf32>,
    %c0_i32_8 = arith.constant 0 : i32
    %9 = arith.cmpi eq, %arg2, %c0_i32_8 : i32
    %10 = arith.extui %9 : i1 to i32
    %c0_i32_9 = arith.constant 0 : i32
    %11 = arith.cmpi ne, %10, %c0_i32_9 : i32
    scf.if %11 {
      %c0_10 = arith.constant 0 : index
      %c0_11 = arith.constant 0 : index
      %12 = vector.load %arg7[%c0_10, %c0_11] : memref<16x96xf32, #tpu.memory_space<vmem>>, vector<16x96xf32>
      %c0_12 = arith.constant 0 : index
      %c0_13 = arith.constant 0 : index
      %13 = vector.load %arg5[%c0_12, %c0_13] : memref<1x96xf32, #tpu.memory_space<vmem>>, vector<1x96xf32>
      %14 = vector.broadcast %13 : vector<1x96xf32> to vector<16x96xf32>
      %15 = arith.addf %12, %14 : vector<16x96xf32>
      %c0_14 = arith.constant 0 : index
      %c0_15 = arith.constant 0 : index
      %16 = vector.load %arg6[%c0_14, %c0_15] : memref<16x96xf32, #tpu.memory_space<vmem>>, vector<16x96xf32>
      tpu.vector_store %arg6[%c0_14, %c0_15], %15 {strides = array<i32>} : memref<16x96xf32, #tpu.memory_space<vmem>>, vector<16x96xf32>,
    } else {
    }
    return
  }
  func.func @transform_0(%arg0: i32, %arg1: i32, %arg2: i32) -> (i32, i32) {
    %c0_i32 = arith.constant 0 : i32
    return %arg0, %arg2 : i32, i32
  }
  func.func @transform_1(%arg0: i32, %arg1: i32, %arg2: i32) -> (i32, i32) {
    %c0_i32 = arith.constant 0 : i32
    return %arg2, %arg1 : i32, i32
  }
  func.func @transform_2(%arg0: i32, %arg1: i32, %arg2: i32) -> (i32, i32) {
    %c0_i32 = arith.constant 0 : i32
    %c0_i32_0 = arith.constant 0 : i32
    return %c0_i32, %arg1 : i32, i32
  }
  func.func @transform_3(%arg0: i32, %arg1: i32, %arg2: i32) -> (i32, i32) {
    %c0_i32 = arith.constant 0 : i32
    return %arg0, %arg1 : i32, i32
  }
}

module attributes {stable_mosaic.version = 11 : i64} {
  func.func @_linear_kernel(%arg0: i32, %arg1: i32, %arg2: i32, %arg3: memref<16x32xf32, #tpu.memory_space<vmem>>, %arg4: memref<32x32xf32, #tpu.memory_space<vmem>>, %arg5: memref<1x32xf32, #tpu.memory_space<vmem>>, %arg6: memref<16x32xf32, #tpu.memory_space<vmem>>, %arg7: memref<16x32xf32, #tpu.memory_space<vmem>>) attributes {dimension_semantics = [#tpu.dimension_semantics<parallel>, #tpu.dimension_semantics<parallel>, #tpu.dimension_semantics<arbitrary>], iteration_bounds = array<i64: 1, 1, 1>, scalar_prefetch = 0 : i64, scratch_operands = 1 : i64, tpu.core_type = #tpu.core_type<tc>, window_params = [{transform_indices = @transform_0, window_bounds = array<i64: 16, 32>}, {transform_indices = @transform_1, window_bounds = array<i64: 32, 32>}, {transform_indices = @transform_2, window_bounds = array<i64: 1, 32>}, {transform_indices = @transform_3, window_bounds = array<i64: 16, 32>}]} {
    %c0_i32 = arith.constant 0 : i32
    %0 = arith.cmpi eq, %arg2, %c0_i32 : i32
    %1 = arith.extui %0 : i1 to i32
    %c0_i32_0 = arith.constant 0 : i32
    %2 = arith.cmpi ne, %1, %c0_i32_0 : i32
    scf.if %2 {
      %cst_10 = arith.constant 0.000000e+00 : f32
      %12 = vector.broadcast %cst_10 : f32 to vector<16x32xf32>
      %c0_11 = arith.constant 0 : index
      %c0_12 = arith.constant 0 : index
      %13 = vector.load %arg7[%c0_11, %c0_12] : memref<16x32xf32, #tpu.memory_space<vmem>>, vector<16x32xf32>
      tpu.vector_store %arg7[%c0_11, %c0_12], %12 {strides = array<i32>} : memref<16x32xf32, #tpu.memory_space<vmem>>, vector<16x32xf32>,
    } else {
    }
    %c0 = arith.constant 0 : index
    %c0_1 = arith.constant 0 : index
    %3 = vector.load %arg7[%c0, %c0_1] : memref<16x32xf32, #tpu.memory_space<vmem>>, vector<16x32xf32>
    %c0_2 = arith.constant 0 : index
    %c0_3 = arith.constant 0 : index
    %4 = vector.load %arg3[%c0_2, %c0_3] : memref<16x32xf32, #tpu.memory_space<vmem>>, vector<16x32xf32>
    %c0_4 = arith.constant 0 : index
    %c0_5 = arith.constant 0 : index
    %5 = vector.load %arg4[%c0_4, %c0_5] : memref<32x32xf32, #tpu.memory_space<vmem>>, vector<32x32xf32>
    %cst = arith.constant dense<0.000000e+00> : vector<16x32xf32>
    %6 = tpu.matmul %4, %5, %cst {dimension_numbers = #tpu.dot_dimension_numbers<[1], [0], [0], [1], [0, 0, 1, 1], [], []>} : vector<16x32xf32>, vector<32x32xf32>, vector<16x32xf32> -> vector<16x32xf32>
    %7 = arith.addf %3, %6 : vector<16x32xf32>
    %c0_6 = arith.constant 0 : index
    %c0_7 = arith.constant 0 : index
    %8 = vector.load %arg7[%c0_6, %c0_7] : memref<16x32xf32, #tpu.memory_space<vmem>>, vector<16x32xf32>
    tpu.vector_store %arg7[%c0_6, %c0_7], %7 {strides = array<i32>} : memref<16x32xf32, #tpu.memory_space<vmem>>, vector<16x32xf32>,
    %c0_i32_8 = arith.constant 0 : i32
    %9 = arith.cmpi eq, %arg2, %c0_i32_8 : i32
    %10 = arith.extui %9 : i1 to i32
    %c0_i32_9 = arith.constant 0 : i32
    %11 = arith.cmpi ne, %10, %c0_i32_9 : i32
    scf.if %11 {
      %c0_10 = arith.constant 0 : index
      %c0_11 = arith.constant 0 : index
      %12 = vector.load %arg7[%c0_10, %c0_11] : memref<16x32xf32, #tpu.memory_space<vmem>>, vector<16x32xf32>
      %c0_12 = arith.constant 0 : index
      %c0_13 = arith.constant 0 : index
      %13 = vector.load %arg5[%c0_12, %c0_13] : memref<1x32xf32, #tpu.memory_space<vmem>>, vector<1x32xf32>
      %14 = vector.broadcast %13 : vector<1x32xf32> to vector<16x32xf32>
      %15 = arith.addf %12, %14 : vector<16x32xf32>
      %c0_14 = arith.constant 0 : index
      %c0_15 = arith.constant 0 : index
      %16 = vector.load %arg6[%c0_14, %c0_15] : memref<16x32xf32, #tpu.memory_space<vmem>>, vector<16x32xf32>
      tpu.vector_store %arg6[%c0_14, %c0_15], %15 {strides = array<i32>} : memref<16x32xf32, #tpu.memory_space<vmem>>, vector<16x32xf32>,
    } else {
    }
    return
  }
  func.func @transform_0(%arg0: i32, %arg1: i32, %arg2: i32) -> (i32, i32) {
    %c0_i32 = arith.constant 0 : i32
    return %arg0, %arg2 : i32, i32
  }
  func.func @transform_1(%arg0: i32, %arg1: i32, %arg2: i32) -> (i32, i32) {
    %c0_i32 = arith.constant 0 : i32
    return %arg2, %arg1 : i32, i32
  }
  func.func @transform_2(%arg0: i32, %arg1: i32, %arg2: i32) -> (i32, i32) {
    %c0_i32 = arith.constant 0 : i32
    %c0_i32_0 = arith.constant 0 : i32
    return %c0_i32, %arg1 : i32, i32
  }
  func.func @transform_3(%arg0: i32, %arg1: i32, %arg2: i32) -> (i32, i32) {
    %c0_i32 = arith.constant 0 : i32
    return %arg0, %arg1 : i32, i32
  }
}

module attributes {stable_mosaic.version = 11 : i64} {
  func.func @_flash_attn_kernel(%arg0: i32, %arg1: i32, %arg2: i32, %arg3: memref<1x8x8xf32, #tpu.memory_space<vmem>>, %arg4: memref<1x8x8xf32, #tpu.memory_space<vmem>>, %arg5: memref<1x8x8xf32, #tpu.memory_space<vmem>>, %arg6: memref<8x8xf32, #tpu.memory_space<vmem>>, %arg7: memref<1x8x8xf32, #tpu.memory_space<vmem>>, %arg8: memref<8x1xf32, #tpu.memory_space<vmem>>, %arg9: memref<8x1xf32, #tpu.memory_space<vmem>>, %arg10: memref<8x8xf32, #tpu.memory_space<vmem>>) attributes {dimension_semantics = [#tpu.dimension_semantics<parallel>, #tpu.dimension_semantics<parallel>, #tpu.dimension_semantics<arbitrary>], iteration_bounds = array<i64: 8, 1, 1>, scalar_prefetch = 0 : i64, scratch_operands = 3 : i64, tpu.core_type = #tpu.core_type<tc>, window_params = [{transform_indices = @transform_0, window_bounds = array<i64: 1, 8, 8>}, {transform_indices = @transform_1, window_bounds = array<i64: 1, 8, 8>}, {transform_indices = @transform_2, window_bounds = array<i64: 1, 8, 8>}, {transform_indices = @transform_3, window_bounds = array<i64: 8, 8>}, {transform_indices = @transform_4, window_bounds = array<i64: 1, 8, 8>}]} {
    %c0_i32 = arith.constant 0 : i32
    %0 = arith.cmpi eq, %arg2, %c0_i32 : i32
    %1 = arith.extui %0 : i1 to i32
    %c0_i32_0 = arith.constant 0 : i32
    %2 = arith.cmpi ne, %1, %c0_i32_0 : i32
    scf.if %2 {
      %cst_28 = arith.constant 0xFF800000 : f32
      %37 = vector.broadcast %cst_28 : f32 to vector<8x1xf32>
      %c0_29 = arith.constant 0 : index
      %c0_30 = arith.constant 0 : index
      %38 = vector.load %arg8[%c0_29, %c0_30] : memref<8x1xf32, #tpu.memory_space<vmem>>, vector<8x1xf32>
      tpu.vector_store %arg8[%c0_29, %c0_30], %37 {strides = array<i32>} : memref<8x1xf32, #tpu.memory_space<vmem>>, vector<8x1xf32>,
      %cst_31 = arith.constant 0.000000e+00 : f32
      %39 = vector.broadcast %cst_31 : f32 to vector<8x1xf32>
      %c0_32 = arith.constant 0 : index
      %c0_33 = arith.constant 0 : index
      %40 = vector.load %arg9[%c0_32, %c0_33] : memref<8x1xf32, #tpu.memory_space<vmem>>, vector<8x1xf32>
      tpu.vector_store %arg9[%c0_32, %c0_33], %39 {strides = array<i32>} : memref<8x1xf32, #tpu.memory_space<vmem>>, vector<8x1xf32>,
      %cst_34 = arith.constant 0.000000e+00 : f32
      %41 = vector.broadcast %cst_34 : f32 to vector<8x8xf32>
      %c0_35 = arith.constant 0 : index
      %c0_36 = arith.constant 0 : index
      %42 = vector.load %arg10[%c0_35, %c0_36] : memref<8x8xf32, #tpu.memory_space<vmem>>, vector<8x8xf32>
      tpu.vector_store %arg10[%c0_35, %c0_36], %41 {strides = array<i32>} : memref<8x8xf32, #tpu.memory_space<vmem>>, vector<8x8xf32>,
    } else {
    }
    %c0 = arith.constant 0 : index
    %c0_1 = arith.constant 0 : index
    %c0_2 = arith.constant 0 : index
    %3 = vector.load %arg3[%c0, %c0_1, %c0_2] : memref<1x8x8xf32, #tpu.memory_space<vmem>>, vector<1x8x8xf32>
    %4 = vector.shape_cast %3 : vector<1x8x8xf32> to vector<8x8xf32>
    %c0_3 = arith.constant 0 : index
    %c0_4 = arith.constant 0 : index
    %c0_5 = arith.constant 0 : index
    %5 = vector.load %arg4[%c0_3, %c0_4, %c0_5] : memref<1x8x8xf32, #tpu.memory_space<vmem>>, vector<1x8x8xf32>
    %6 = vector.shape_cast %5 : vector<1x8x8xf32> to vector<8x8xf32>
    %c0_6 = arith.constant 0 : index
    %c0_7 = arith.constant 0 : index
    %c0_8 = arith.constant 0 : index
    %7 = vector.load %arg5[%c0_6, %c0_7, %c0_8] : memref<1x8x8xf32, #tpu.memory_space<vmem>>, vector<1x8x8xf32>
    %8 = vector.shape_cast %7 : vector<1x8x8xf32> to vector<8x8xf32>
    %cst = arith.constant dense<0.000000e+00> : vector<8x8xf32>
    %9 = tpu.matmul %4, %6, %cst {dimension_numbers = #tpu.dot_dimension_numbers<[1], [1], [0], [0], [0, 0, 1, 0], [], []>} : vector<8x8xf32>, vector<8x8xf32>, vector<8x8xf32> -> vector<8x8xf32>
    %c0_9 = arith.constant 0 : index
    %c0_10 = arith.constant 0 : index
    %10 = vector.load %arg6[%c0_9, %c0_10] : memref<8x8xf32, #tpu.memory_space<vmem>>, vector<8x8xf32>
    %11 = arith.addf %9, %10 : vector<8x8xf32>
    %c0_11 = arith.constant 0 : index
    %c0_12 = arith.constant 0 : index
    %12 = vector.load %arg8[%c0_11, %c0_12] : memref<8x1xf32, #tpu.memory_space<vmem>>, vector<8x1xf32>
    %cst_13 = arith.constant dense<0xFF800000> : vector<8xf32>
    %13 = vector.multi_reduction <maximumf>, %11, %cst_13 [1] : vector<8x8xf32> to vector<8xf32>
    %14 = vector.shape_cast %13 : vector<8xf32> to vector<8x1xf32>
    %15 = arith.maximumf %12, %14 : vector<8x1xf32>
    %16 = arith.subf %12, %15 : vector<8x1xf32>
    %17 = math.exp %16 : vector<8x1xf32>
    %18 = vector.broadcast %15 : vector<8x1xf32> to vector<8x8xf32>
    %19 = arith.subf %11, %18 : vector<8x8xf32>
    %20 = math.exp %19 : vector<8x8xf32>
    %c0_14 = arith.constant 0 : index
    %c0_15 = arith.constant 0 : index
    %21 = vector.load %arg9[%c0_14, %c0_15] : memref<8x1xf32, #tpu.memory_space<vmem>>, vector<8x1xf32>
    %22 = arith.mulf %17, %21 : vector<8x1xf32>
    %cst_16 = arith.constant dense<0.000000e+00> : vector<8xf32>
    %23 = vector.multi_reduction <add>, %20, %cst_16 [1] : vector<8x8xf32> to vector<8xf32>
    %24 = vector.shape_cast %23 : vector<8xf32> to vector<8x1xf32>
    %25 = arith.addf %22, %24 : vector<8x1xf32>
    %c0_17 = arith.constant 0 : index
    %c0_18 = arith.constant 0 : index
    %26 = vector.load %arg9[%c0_17, %c0_18] : memref<8x1xf32, #tpu.memory_space<vmem>>, vector<8x1xf32>
    tpu.vector_store %arg9[%c0_17, %c0_18], %25 {strides = array<i32>} : memref<8x1xf32, #tpu.memory_space<vmem>>, vector<8x1xf32>,
    %c0_19 = arith.constant 0 : index
    %c0_20 = arith.constant 0 : index
    %27 = vector.load %arg10[%c0_19, %c0_20] : memref<8x8xf32, #tpu.memory_space<vmem>>, vector<8x8xf32>
    %28 = vector.broadcast %17 : vector<8x1xf32> to vector<8x8xf32>
    %29 = arith.mulf %28, %27 : vector<8x8xf32>
    %cst_21 = arith.constant dense<0.000000e+00> : vector<8x8xf32>
    %30 = tpu.matmul %20, %8, %cst_21 {dimension_numbers = #tpu.dot_dimension_numbers<[1], [0], [0], [1], [0, 0, 1, 1], [], []>} : vector<8x8xf32>, vector<8x8xf32>, vector<8x8xf32> -> vector<8x8xf32>
    %31 = arith.addf %29, %30 : vector<8x8xf32>
    %c0_22 = arith.constant 0 : index
    %c0_23 = arith.constant 0 : index
    %32 = vector.load %arg10[%c0_22, %c0_23] : memref<8x8xf32, #tpu.memory_space<vmem>>, vector<8x8xf32>
    tpu.vector_store %arg10[%c0_22, %c0_23], %31 {strides = array<i32>} : memref<8x8xf32, #tpu.memory_space<vmem>>, vector<8x8xf32>,
    %c0_24 = arith.constant 0 : index
    %c0_25 = arith.constant 0 : index
    %33 = vector.load %arg8[%c0_24, %c0_25] : memref<8x1xf32, #tpu.memory_space<vmem>>, vector<8x1xf32>
    tpu.vector_store %arg8[%c0_24, %c0_25], %15 {strides = array<i32>} : memref<8x1xf32, #tpu.memory_space<vmem>>, vector<8x1xf32>,
    %c0_i32_26 = arith.constant 0 : i32
    %34 = arith.cmpi eq, %arg2, %c0_i32_26 : i32
    %35 = arith.extui %34 : i1 to i32
    %c0_i32_27 = arith.constant 0 : i32
    %36 = arith.cmpi ne, %35, %c0_i32_27 : i32
    scf.if %36 {
      %c0_28 = arith.constant 0 : index
      %c0_29 = arith.constant 0 : index
      %37 = vector.load %arg10[%c0_28, %c0_29] : memref<8x8xf32, #tpu.memory_space<vmem>>, vector<8x8xf32>
      %c0_30 = arith.constant 0 : index
      %c0_31 = arith.constant 0 : index
      %38 = vector.load %arg9[%c0_30, %c0_31] : memref<8x1xf32, #tpu.memory_space<vmem>>, vector<8x1xf32>
      %39 = tpu.reciprocal %38 : vector<8x1xf32> -> vector<8x1xf32>
      %40 = vector.broadcast %39 : vector<8x1xf32> to vector<8x8xf32>
      %41 = arith.mulf %37, %40 : vector<8x8xf32>
      %c0_32 = arith.constant 0 : index
      %c0_33 = arith.constant 0 : index
      %c0_34 = arith.constant 0 : index
      %42 = vector.load %arg7[%c0_32, %c0_33, %c0_34] : memref<1x8x8xf32, #tpu.memory_space<vmem>>, vector<1x8x8xf32>
      %43 = vector.shape_cast %42 : vector<1x8x8xf32> to vector<8x8xf32>
      %44 = vector.shape_cast %41 : vector<8x8xf32> to vector<1x8x8xf32>
      tpu.vector_store %arg7[%c0_32, %c0_33, %c0_34], %44 {strides = array<i32>} : memref<1x8x8xf32, #tpu.memory_space<vmem>>, vector<1x8x8xf32>,
    } else {
    }
    return
  }
  func.func @transform_0(%arg0: i32, %arg1: i32, %arg2: i32) -> (i32, i32, i32) {
    %c0_i32 = arith.constant 0 : i32
    %c0_i32_0 = arith.constant 0 : i32
    return %arg0, %arg1, %c0_i32 : i32, i32, i32
  }
  func.func @transform_1(%arg0: i32, %arg1: i32, %arg2: i32) -> (i32, i32, i32) {
    %c0_i32 = arith.constant 0 : i32
    %c0_i32_0 = arith.constant 0 : i32
    return %arg0, %arg2, %c0_i32 : i32, i32, i32
  }
  func.func @transform_2(%arg0: i32, %arg1: i32, %arg2: i32) -> (i32, i32, i32) {
    %c0_i32 = arith.constant 0 : i32
    %c0_i32_0 = arith.constant 0 : i32
    return %arg0, %arg2, %c0_i32 : i32, i32, i32
  }
  func.func @transform_3(%arg0: i32, %arg1: i32, %arg2: i32) -> (i32, i32) {
    %c0_i32 = arith.constant 0 : i32
    return %arg1, %arg2 : i32, i32
  }
  func.func @transform_4(%arg0: i32, %arg1: i32, %arg2: i32) -> (i32, i32, i32) {
    %c0_i32 = arith.constant 0 : i32
    %c0_i32_0 = arith.constant 0 : i32
    return %arg0, %arg1, %c0_i32 : i32, i32, i32
  }
}

</mosaic_0001>

<llo_original>
// kernel: prefill_attention.5
$region0: #{prefill_attention.5}
  #allocation0 [shape = 'u32[]', space=smem, size = 0x4, offset = 0x4, fixed_abs, tag = 'smem constant byte address 0x4 - core index']
  #allocation1 [shape = 'u32[144,128]{1,0:T(1,128)}', space=vmem, size = 0x12000, scoped, tag = 'internal scratch']
  #allocation2 [shape = 'f32[16,32]{1,0:T(8,128)}', space=vmem, size = 0x2000, scoped, tag = 'scratch operand']
  %s0 = inlined_call_operand.vmem [shape: f32[16,32], index: 0, kind: input, shape index: {}]
  %s1 = inlined_call_operand.vmem [shape: f32[32,32], index: 1, kind: input, shape index: {}]
  %s2 = inlined_call_operand.vmem [shape: f32[1,32], index: 2, kind: input, shape index: {}]
  %s3 = inlined_call_operand.hbm [shape: f32[16,32], index: 3, kind: output, shape index: {}]
  %s4 = sld [smem:[#allocation0]]
  $region30: #{prefill_attention.5} parent=0
    _
  %s6 = ssub.s32 1, %s4
  %s7 = scalar_select 0, %s6, %s4
  $region1: #{prefill_attention.5} parent=0
    #allocation3 [shape = 'u8[8192]{0}', space=vmem, size = 0x2000, scoped, tag = 'output window, operand 0, single buffered']
    #allocation4 [shape = 's32[1]{0}', space=sflag, size = 0x4, scoped, tag = 'scoped memory for prefill_attention.5']
    %8 = vsyncpa [#allocation4], 0
    // Predicated region
    $region2: #{prefill_attention.5} parent=1 // pred_check
      _
    $region3: #{prefill_attention.5} parent=1 // pred_check_branch
      %10 = sbr.rel (0) target = $region5
    $region4: #{prefill_attention.5} parent=1 // pred_region
      _
    $region5: #{prefill_attention.5} parent=1 // pred_fallthru
      _
    // Predicated region
    $region6: #{prefill_attention.5} parent=1 // pred_check
      _
    $region7: #{prefill_attention.5} parent=1 // pred_check_branch
      %12 = sbr.rel (0) target = $region9
    $region8: #{prefill_attention.5} parent=1 // pred_region
      _
    $region9: #{prefill_attention.5} parent=1 // pred_fallthru
      _
    // Predicated region
    $region10: #{prefill_attention.5} parent=1 // pred_check
      _
    $region11: #{prefill_attention.5} parent=1 // pred_check_branch
      %14 = sbr.rel (0) target = $region13
    $region12: #{prefill_attention.5} parent=1 // pred_region
      _
    $region13: #{prefill_attention.5} parent=1 // pred_fallthru
      _
    %p15 = scmp.eq.s32.totalorder 0, 0
    // Predicated region
    $region14: #{prefill_attention.5} parent=1 // pred_check
      %p16 = pneg %p15
    $region15: #{prefill_attention.5} parent=1 // pred_check_branch
      %18 = sbr.rel (%p16) target = $region17
    $region16: #{prefill_attention.5} parent=1 // pred_region
      %vm19 = vcmask 261120
      %20 = vst.msk [vmem:[#allocation2] sm:$0xff] %vm19, 0.0
      %21 = vst.msk [vmem:[#allocation2 + $0x8] sm:$0xff] %vm19, 0.0
    $region17: #{prefill_attention.5} parent=1 // pred_fallthru
      _
    %v22 = vld [vmem:[#allocation2] sm:$0xff]
    %v23 = vld [vmem:[#allocation2 + $0x8] sm:$0xff]
    %v24 = vld [vmem:[%s0] sm:$0xff]
    %v25 = vld [vmem:[%s0 + $0x8] sm:$0xff]
    %v26 = vld [vmem:[%s1] sm:$0xff]
    %v27 = vld [vmem:[%s1 + $0x8] sm:$0xff]
    %v28 = vld [vmem:[%s1 + $0x10] sm:$0xff]
    %v29 = vld [vmem:[%s1 + $0x18] sm:$0xff]
    %vm30 = vcmask 261120
    %v32 = vsel %vm30, %v24, 0
    %v35 = vsel %vm30, %v25, 0
    %37 = vmatprep.subr.mxu0 0.0
    %38 = vmatpush1.msra.mxu0 0.0
    %39 = vmatprep.subr.mxu0 0.0
    %40 = vmatpush1.msra.mxu0 0.0
    %41 = vmatprep.subr.mxu0 0.0
    %42 = vmatpush1.msra.mxu0 0.0
    %43 = vmatprep.subr.mxu0 0.0
    %44 = vmatpush1.msra.mxu0 0.0
    %45 = vmatprep.subr.mxu0 0.0
    %46 = vmatpush1.msra.mxu0 0.0
    %47 = vmatprep.subr.mxu0 0.0
    %48 = vmatpush1.msra.mxu0 0.0
    %49 = vmatprep.subr.mxu0 0.0
    %50 = vmatpush1.msra.mxu0 0.0
    %51 = vmatprep.subr.mxu0 0.0
    %52 = vmatpush1.msra.mxu0 0.0
    %53 = vmatprep.subr.mxu0 0.0
    %54 = vmatpush1.msra.mxu0 0.0
    %55 = vmatprep.subr.mxu0 0.0
    %56 = vmatpush1.msra.mxu0 0.0
    %57 = vmatprep.subr.mxu0 0.0
    %58 = vmatpush1.msra.mxu0 0.0
    %59 = vmatprep.subr.mxu0 0.0
    %60 = vmatpush1.msra.mxu0 0.0
    %61 = vmatprep.subr.mxu0 0.0
    %62 = vmatpush1.msra.mxu0 %v29
    %63 = vmatprep.subr.mxu0 0.0
    %64 = vmatpush1.msra.mxu0 %v28
    %65 = vmatprep.subr.mxu0 0.0
    %66 = vmatpush1.msra.mxu0 %v27
    %67 = vmatprep.subr.mxu0 0.0
    %68 = vmatpush1.msra.mxu0 %v26
    %69 = vmatprep.subr.mxu0 0.0
    %70 = vmatpush2.msra.mxu0 0.0
    %71 = vmatprep.subr.mxu0 0.0
    %72 = vmatpush2.msra.mxu0 0.0
    %73 = vmatprep.subr.mxu0 0.0
    %74 = vmatpush2.msra.mxu0 0.0
    %75 = vmatprep.subr.mxu0 0.0
    %76 = vmatpush2.msra.mxu0 0.0
    %77 = vmatprep.subr.mxu0 0.0
    %78 = vmatpush2.msra.mxu0 0.0
    %79 = vmatprep.subr.mxu0 0.0
    %80 = vmatpush2.msra.mxu0 0.0
    %81 = vmatprep.subr.mxu0 0.0
    %82 = vmatpush2.msra.mxu0 0.0
    %83 = vmatprep.subr.mxu0 0.0
    %84 = vmatpush2.msra.mxu0 0.0
    %85 = vmatprep.subr.mxu0 0.0
    %86 = vmatpush2.msra.mxu0 0.0
    %87 = vmatprep.subr.mxu0 0.0
    %88 = vmatpush2.msra.mxu0 0.0
    %89 = vmatprep.subr.mxu0 0.0
    %90 = vmatpush2.msra.mxu0 0.0
    %91 = vmatprep.subr.mxu0 0.0
    %92 = vmatpush2.msra.mxu0 0.0
    %93 = vmatprep.subr.mxu0 0.0
    %94 = vmatpush2.msra.mxu0 0.0
    %95 = vmatprep.subr.mxu0 0.0
    %96 = vmatpush2.msra.mxu0 0.0
    %97 = vmatprep.subr.mxu0 0.0
    %98 = vmatpush2.msra.mxu0 0.0
    %99 = vmatprep.subr.mxu0 0.0
    %100 = vmatpush2.msra.mxu0 0.0
    %101 = vmatprep.mubr.f32.mxu0 0.0
    %102 = vmatmul.mubr.f32.gmra.mxu0 %v32
    %v103 = vpop.f32.mrf.mxu0
    %v104 = vadd.f32 0.0, %v103
    %v105 = vpop.f32.mrf.mxu0
    %106 = vmatprep.mubr.f32.mxu0 0.0
    %107 = vmatmul.mubr.f32.gmra.mxu0 %v35
    %v108 = vpop.f32.mrf.mxu0
    %v109 = vadd.f32 0.0, %v108
    %v110 = vpop.f32.mrf.mxu0
    %111 = vdwg.mxu0
    %v112 = vadd.f32 %v22, %v104
    %v113 = vadd.f32 %v23, %v109
    %114 = vst.msk [vmem:[#allocation2] sm:$0xff] %vm30, %v112
    %115 = vst.msk [vmem:[#allocation2 + $0x8] sm:$0xff] %vm30, %v113
    // Predicated region
    $region18: #{prefill_attention.5} parent=1 // pred_check
      %p116 = pneg %p15
    $region19: #{prefill_attention.5} parent=1 // pred_check_branch
      %118 = sbr.rel (%p116) target = $region21
    $region20: #{prefill_attention.5} parent=1 // pred_region
      %v119 = vld [vmem:[#allocation2] sm:$0xff]
      %v120 = vld [vmem:[#allocation2 + $0x8] sm:$0xff]
      %v121 = vld [vmem:[%s2] sm:$0x1]
      %v123 = vlaneseq
      %v124 = vshrl.u32 %v123, 7
      %v125 = vsub.s32 0, %v124
      %v126 = vrot.slane %v121, %v125
      %v128 = vadd.f32 %v119, %v126
      %v129 = vadd.f32 %v120, %v126
      %130 = vst.msk [vmem:[#allocation3] sm:$0xff] %vm30, %v128
      %131 = vst.msk [vmem:[#allocation3 + $0x8] sm:$0xff] %vm30, %v129
    $region21: #{prefill_attention.5} parent=1 // pred_fallthru
      _
    // Predicated region
    $region22: #{prefill_attention.5} parent=1 // pred_check
      _
    $region23: #{prefill_attention.5} parent=1 // pred_check_branch
      %133 = sbr.rel (0) target = $region25
    $region24: #{prefill_attention.5} parent=1 // pred_region
      %s135 = ssub.s32 256, 256
      %136 = vsyncadd [#allocation4], %s135
      %s137 = sshll.u32 [#allocation3], 4
      %s138 = int_to_ptr.vmem [resolvable:$true] %s137
      %143 = dma.vmem_to_hbm [thread:$0]  %s138, 256, %s3, [#allocation4], 128, 128, 8
    $region25: #{prefill_attention.5} parent=1 // pred_fallthru
      _
    // Predicated region
    $region26: #{prefill_attention.5} parent=1 // pred_check
      _
    $region27: #{prefill_attention.5} parent=1 // pred_check_branch
      %145 = sbr.rel (0) target = $region29
    $region28: #{prefill_attention.5} parent=1 // pred_region
      %146 = dma.done [#allocation4], 256
    $region29: #{prefill_attention.5} parent=1 // pred_fallthru
      _
    %147 = vsyncpa [#allocation4], 1

// kernel: prefill_attention.3
$region0: #{prefill_attention.3}
  #allocation0 [shape = 'u32[]', space=smem, size = 0x4, offset = 0x4, fixed_abs, tag = 'smem constant byte address 0x4 - core index']
  #allocation1 [shape = 'u32[144,128]{1,0:T(1,128)}', space=vmem, size = 0x12000, scoped, tag = 'internal scratch']
  #allocation2 [shape = 'f32[16,96]{1,0:T(8,128)}', space=vmem, size = 0x2000, scoped, tag = 'scratch operand']
  %s0 = inlined_call_operand.vmem [shape: f32[16,32], index: 0, kind: input, shape index: {}]
  %s1 = inlined_call_operand.hbm [shape: f32[32,96], index: 1, kind: input, shape index: {}]
  %s2 = inlined_call_operand.vmem [shape: f32[1,96], index: 2, kind: input, shape index: {}]
  %s3 = inlined_call_operand.vmem [shape: f32[16,96], index: 3, kind: output, shape index: {}]
  %s4 = sld [smem:[#allocation0]]
  $region34: #{prefill_attention.3} parent=0
    _
  %s6 = ssub.s32 1, %s4
  %s7 = scalar_select 0, %s6, %s4
  $region1: #{prefill_attention.3} parent=0
    #allocation3 [shape = 'u8[16384]{0}', space=vmem, size = 0x4000, scoped, tag = 'input window, operand 1, single buffered']
    #allocation4 [shape = 's32[1]{0}', space=sflag, size = 0x4, scoped, tag = 'scoped memory for prefill_attention.3']
    %8 = vsyncpa [#allocation4], 0
    // Predicated region
    $region2: #{prefill_attention.3} parent=1 // pred_check
      _
    $region3: #{prefill_attention.3} parent=1 // pred_check_branch
      %10 = sbr.rel (0) target = $region5
    $region4: #{prefill_attention.3} parent=1 // pred_region
      _
    $region5: #{prefill_attention.3} parent=1 // pred_fallthru
      _
    // Predicated region
    $region6: #{prefill_attention.3} parent=1 // pred_check
      _
    $region7: #{prefill_attention.3} parent=1 // pred_check_branch
      %12 = sbr.rel (0) target = $region9
    $region8: #{prefill_attention.3} parent=1 // pred_region
      %s14 = ssub.s32 512, 512
      %15 = vsyncadd [#allocation4], %s14
      %s16 = sshll.u32 [#allocation3], 4
      %s17 = int_to_ptr.vmem [resolvable:$true] %s16
      %22 = dma.hbm_to_vmem [thread:$0]  %s1, 512, %s17, [#allocation4], 128, 128, 8
    $region9: #{prefill_attention.3} parent=1 // pred_fallthru
      _
    // Predicated region
    $region10: #{prefill_attention.3} parent=1 // pred_check
      _
    $region11: #{prefill_attention.3} parent=1 // pred_check_branch
      %24 = sbr.rel (0) target = $region13
    $region12: #{prefill_attention.3} parent=1 // pred_region
      _
    $region13: #{prefill_attention.3} parent=1 // pred_fallthru
      _
    // Predicated region
    $region14: #{prefill_attention.3} parent=1 // pred_check
      _
    $region15: #{prefill_attention.3} parent=1 // pred_check_branch
      %26 = sbr.rel (0) target = $region17
    $region16: #{prefill_attention.3} parent=1 // pred_region
      %27 = dma.done [#allocation4], 512
    $region17: #{prefill_attention.3} parent=1 // pred_fallthru
      _
    %p28 = scmp.eq.s32.totalorder 0, 0
    // Predicated region
    $region18: #{prefill_attention.3} parent=1 // pred_check
      %p29 = pneg %p28
    $region19: #{prefill_attention.3} parent=1 // pred_check_branch
      %31 = sbr.rel (%p29) target = $region21
    $region20: #{prefill_attention.3} parent=1 // pred_region
      %vm32 = vcmask 785408
      %33 = vst.msk [vmem:[#allocation2] sm:$0xff] %vm32, 0.0
      %34 = vst.msk [vmem:[#allocation2 + $0x8] sm:$0xff] %vm32, 0.0
    $region21: #{prefill_attention.3} parent=1 // pred_fallthru
      _
    %v35 = vld [vmem:[#allocation2] sm:$0xff]
    %v36 = vld [vmem:[#allocation2 + $0x8] sm:$0xff]
    %v37 = vld [vmem:[%s0] sm:$0xff]
    %v38 = vld [vmem:[%s0 + $0x8] sm:$0xff]
    %v39 = vld [vmem:[#allocation3] sm:$0xff]
    %v40 = vld [vmem:[#allocation3 + $0x8] sm:$0xff]
    %v41 = vld [vmem:[#allocation3 + $0x10] sm:$0xff]
    %v42 = vld [vmem:[#allocation3 + $0x18] sm:$0xff]
    %vm43 = vcmask 261120
    %v45 = vsel %vm43, %v37, 0
    %v48 = vsel %vm43, %v38, 0
    %50 = vmatprep.subr.mxu0 0.0
    %51 = vmatpush1.msra.mxu0 0.0
    %52 = vmatprep.subr.mxu0 0.0
    %53 = vmatpush1.msra.mxu0 0.0
    %54 = vmatprep.subr.mxu0 0.0
    %55 = vmatpush1.msra.mxu0 0.0
    %56 = vmatprep.subr.mxu0 0.0
    %57 = vmatpush1.msra.mxu0 0.0
    %58 = vmatprep.subr.mxu0 0.0
    %59 = vmatpush1.msra.mxu0 0.0
    %60 = vmatprep.subr.mxu0 0.0
    %61 = vmatpush1.msra.mxu0 0.0
    %62 = vmatprep.subr.mxu0 0.0
    %63 = vmatpush1.msra.mxu0 0.0
    %64 = vmatprep.subr.mxu0 0.0
    %65 = vmatpush1.msra.mxu0 0.0
    %66 = vmatprep.subr.mxu0 0.0
    %67 = vmatpush1.msra.mxu0 0.0
    %68 = vmatprep.subr.mxu0 0.0
    %69 = vmatpush1.msra.mxu0 0.0
    %70 = vmatprep.subr.mxu0 0.0
    %71 = vmatpush1.msra.mxu0 0.0
    %72 = vmatprep.subr.mxu0 0.0
    %73 = vmatpush1.msra.mxu0 0.0
    %74 = vmatprep.subr.mxu0 0.0
    %75 = vmatpush1.msra.mxu0 %v42
    %76 = vmatprep.subr.mxu0 0.0
    %77 = vmatpush1.msra.mxu0 %v41
    %78 = vmatprep.subr.mxu0 0.0
    %79 = vmatpush1.msra.mxu0 %v40
    %80 = vmatprep.subr.mxu0 0.0
    %81 = vmatpush1.msra.mxu0 %v39
    %82 = vmatprep.subr.mxu0 0.0
    %83 = vmatpush2.msra.mxu0 0.0
    %84 = vmatprep.subr.mxu0 0.0
    %85 = vmatpush2.msra.mxu0 0.0
    %86 = vmatprep.subr.mxu0 0.0
    %87 = vmatpush2.msra.mxu0 0.0
    %88 = vmatprep.subr.mxu0 0.0
    %89 = vmatpush2.msra.mxu0 0.0
    %90 = vmatprep.subr.mxu0 0.0
    %91 = vmatpush2.msra.mxu0 0.0
    %92 = vmatprep.subr.mxu0 0.0
    %93 = vmatpush2.msra.mxu0 0.0
    %94 = vmatprep.subr.mxu0 0.0
    %95 = vmatpush2.msra.mxu0 0.0
    %96 = vmatprep.subr.mxu0 0.0
    %97 = vmatpush2.msra.mxu0 0.0
    %98 = vmatprep.subr.mxu0 0.0
    %99 = vmatpush2.msra.mxu0 0.0
    %100 = vmatprep.subr.mxu0 0.0
    %101 = vmatpush2.msra.mxu0 0.0
    %102 = vmatprep.subr.mxu0 0.0
    %103 = vmatpush2.msra.mxu0 0.0
    %104 = vmatprep.subr.mxu0 0.0
    %105 = vmatpush2.msra.mxu0 0.0
    %106 = vmatprep.subr.mxu0 0.0
    %107 = vmatpush2.msra.mxu0 0.0
    %108 = vmatprep.subr.mxu0 0.0
    %109 = vmatpush2.msra.mxu0 0.0
    %110 = vmatprep.subr.mxu0 0.0
    %111 = vmatpush2.msra.mxu0 0.0
    %112 = vmatprep.subr.mxu0 0.0
    %113 = vmatpush2.msra.mxu0 0.0
    %114 = vmatprep.mubr.f32.mxu0 0.0
    %115 = vmatmul.mubr.f32.gmra.mxu0 %v45
    %v116 = vpop.f32.mrf.mxu0
    %v117 = vadd.f32 0.0, %v116
    %v118 = vpop.f32.mrf.mxu0
    %119 = vmatprep.mubr.f32.mxu0 0.0
    %120 = vmatmul.mubr.f32.gmra.mxu0 %v48
    %v121 = vpop.f32.mrf.mxu0
    %v122 = vadd.f32 0.0, %v121
    %v123 = vpop.f32.mrf.mxu0
    %124 = vdwg.mxu0
    %v125 = vadd.f32 %v35, %v117
    %v126 = vadd.f32 %v36, %v122
    %vm127 = vcmask 785408
    %128 = vst.msk [vmem:[#allocation2] sm:$0xff] %vm127, %v125
    %129 = vst.msk [vmem:[#allocation2 + $0x8] sm:$0xff] %vm127, %v126
    // Predicated region
    $region22: #{prefill_attention.3} parent=1 // pred_check
      %p130 = pneg %p28
    $region23: #{prefill_attention.3} parent=1 // pred_check_branch
      %132 = sbr.rel (%p130) target = $region25
    $region24: #{prefill_attention.3} parent=1 // pred_region
      %v133 = vld [vmem:[#allocation2] sm:$0xff]
      %v134 = vld [vmem:[#allocation2 + $0x8] sm:$0xff]
      %v135 = vld [vmem:[%s2] sm:$0x1]
      %v137 = vlaneseq
      %v138 = vshrl.u32 %v137, 7
      %v139 = vsub.s32 0, %v138
      %v140 = vrot.slane %v135, %v139
      %v142 = vadd.f32 %v133, %v140
      %v143 = vadd.f32 %v134, %v140
      %144 = vst.msk [vmem:[%s3] sm:$0xff] %vm127, %v142
      %145 = vst.msk [vmem:[%s3 + $0x8] sm:$0xff] %vm127, %v143
    $region25: #{prefill_attention.3} parent=1 // pred_fallthru
      _
    // Predicated region
    $region26: #{prefill_attention.3} parent=1 // pred_check
      _
    $region27: #{prefill_attention.3} parent=1 // pred_check_branch
      %147 = sbr.rel (0) target = $region29
    $region28: #{prefill_attention.3} parent=1 // pred_region
      _
    $region29: #{prefill_attention.3} parent=1 // pred_fallthru
      _
    // Predicated region
    $region30: #{prefill_attention.3} parent=1 // pred_check
      _
    $region31: #{prefill_attention.3} parent=1 // pred_check_branch
      %149 = sbr.rel (0) target = $region33
    $region32: #{prefill_attention.3} parent=1 // pred_region
      _
    $region33: #{prefill_attention.3} parent=1 // pred_fallthru
      _
    %150 = vsyncpa [#allocation4], 1

// kernel: prefill_attention.4
$region0: #{prefill_attention.4}
  #allocation0 [shape = 'u32[]', space=smem, size = 0x4, offset = 0x4, fixed_abs, tag = 'smem constant byte address 0x4 - core index']
  #allocation1 [shape = 'u32[144,128]{1,0:T(1,128)}', space=vmem, size = 0x12000, scoped, tag = 'internal scratch']
  #allocation2 [shape = 'f32[8,1]{1,0:T(8,128)}', space=vmem, size = 0x1000, scoped, tag = 'scratch operand']
  #allocation3 [shape = 'f32[8,1]{1,0:T(8,128)}', space=vmem, size = 0x1000, scoped, tag = 'scratch operand']
  #allocation4 [shape = 'f32[8,8]{1,0:T(8,128)}', space=vmem, size = 0x1000, scoped, tag = 'scratch operand']
  %s0 = inlined_call_operand.vmem [shape: f32[8,8,8], index: 0, kind: input, shape index: {}]
  %s1 = inlined_call_operand.vmem [shape: f32[8,8,8], index: 1, kind: input, shape index: {}]
  %s2 = inlined_call_operand.vmem [shape: f32[8,8,8], index: 2, kind: input, shape index: {}]
  %s3 = inlined_call_operand.vmem [shape: f32[8,8], index: 3, kind: input, shape index: {}]
  %s4 = inlined_call_operand.vmem [shape: f32[8,8,8], index: 4, kind: output, shape index: {}]
  %s5 = sld [smem:[#allocation0]]
  $region57: #{prefill_attention.4} parent=0
    _
  %s7 = ssub.s32 1, %s5
  %s8 = scalar_select 0, %s7, %s5
  loop: start=0, step=1, limit=10
  $region2: #{prefill_attention.4} parent=0 // loop_pre_header
    _
  $region3: #{prefill_attention.4} parent=0 // loop_header
    %s10 = sphi 0, %s14
    %p11 = scmp.ge.s32.totalorder %s10, 10
    %s17 = sphi 0, %s36
    %s18 = sphi 0, %s32
    %s19 = sphi 0, %s28
    %s20 = sphi 0, %s17
    %s21 = sphi 0, %s18
    %s22 = sphi 0, %s19
    %s23 = sphi 0, %s20
    %s24 = sphi 0, %s21
    %s25 = sphi 0, %s22
    %s41 = sphi 0, %s43
    %s44 = sphi 0, %s41
    %s45 = sphi 0, %s44
    %s61 = sphi 0, %s45
    %s69 = sphi 0, %s71
    %s72 = sphi 0, %s69
    %s73 = sphi 0, %s72
    %s89 = sphi 0, %s73
    %s97 = sphi 0, %s99
    %s100 = sphi 0, %s97
    %s101 = sphi 0, %s100
    %s117 = sphi 0, %s101
    %s125 = sphi 0, %s127
    %s128 = sphi 0, %s125
    %s129 = sphi 0, %s128
    %s145 = sphi 0, %s129
    %s153 = sphi 0, %s155
    %s156 = sphi 0, %s153
    %s157 = sphi 0, %s156
    %s173 = sphi 0, %s157
  $region4: #{prefill_attention.4} parent=0 // loop_header_branch
    %13 = sbr.rel (%p11) target = $region8
  $region5: #{prefill_attention.4} parent=0 // loop_body
    %s15 = ssub.s32 %s10, 1
    %s16 = ssub.s32 %s10, 2
    %s26 = sadd.s32 1, %s19
    %p27 = scmp.ge.s32.totalorder %s26, 1
    %s28 = scalar_select %p27, 0, %s26
    %s29 = sadd.s32 1, %s18
    %s30 = scalar_select %p27, %s29, %s18
    %p31 = scmp.ge.s32.totalorder %s30, 1
    %s32 = scalar_select %p31, 0, %s30
    %s33 = sadd.s32 1, %s17
    %s34 = scalar_select %p31, %s33, %s17
    %p35 = scmp.ge.s32.totalorder %s34, 8
    %s36 = scalar_select %p35, 0, %s34
    %s37 = ssub.s32 %s17, %s36
    %s38 = ssub.s32 %s18, %s32
    %s39 = sor.u32 %s37, %s38
    %p40 = scmp.eq.s32.totalorder %s39, 0
    %s42 = sadd.s32 %s41, 1
    %s43 = scalar_select %p40, %s41, %s42
    %p46 = pneg %p40
    %p47 = scmp.eq.s32.totalorder %s10, 7
    %p48 = por %p46, %p47
    %p49 = scmp.ne.s32.totalorder %s41, %s44
    %p50 = scmp.eq.s32.totalorder %s10, 0
    %p51 = por %p49, %p50
    %p52 = scmp.ne.s32.totalorder %s41, %s44
    %p53 = scmp.eq.s32.totalorder %s15, 7
    %p54 = por %p52, %p53
    %p55 = scmp.ne.s32.totalorder %s44, %s45
    %p56 = scmp.eq.s32.totalorder %s15, 0
    %p57 = por %p55, %p56
    %p58 = scmp.ne.s32.totalorder %s44, %s45
    %p59 = scmp.eq.s32.totalorder %s16, 7
    %p60 = por %p58, %p59
    %p62 = scmp.ne.s32.totalorder %s45, %s61
    %p63 = scmp.eq.s32.totalorder %s16, 0
    %p64 = por %p62, %p63
    %s65 = ssub.s32 %s17, %s36
    %s66 = ssub.s32 %s19, %s28
    %s67 = sor.u32 %s65, %s66
    %p68 = scmp.eq.s32.totalorder %s67, 0
    %s70 = sadd.s32 %s69, 1
    %s71 = scalar_select %p68, %s69, %s70
    %p74 = pneg %p68
    %p75 = scmp.eq.s32.totalorder %s10, 7
    %p76 = por %p74, %p75
    %p77 = scmp.ne.s32.totalorder %s69, %s72
    %p78 = scmp.eq.s32.totalorder %s10, 0
    %p79 = por %p77, %p78
    %p80 = scmp.ne.s32.totalorder %s69, %s72
    %p81 = scmp.eq.s32.totalorder %s15, 7
    %p82 = por %p80, %p81
    %p83 = scmp.ne.s32.totalorder %s72, %s73
    %p84 = scmp.eq.s32.totalorder %s15, 0
    %p85 = por %p83, %p84
    %p86 = scmp.ne.s32.totalorder %s72, %s73
    %p87 = scmp.eq.s32.totalorder %s16, 7
    %p88 = por %p86, %p87
    %p90 = scmp.ne.s32.totalorder %s73, %s89
    %p91 = scmp.eq.s32.totalorder %s16, 0
    %p92 = por %p90, %p91
    %s93 = ssub.s32 %s17, %s36
    %s94 = ssub.s32 %s19, %s28
    %s95 = sor.u32 %s93, %s94
    %p96 = scmp.eq.s32.totalorder %s95, 0
    %s98 = sadd.s32 %s97, 1
    %s99 = scalar_select %p96, %s97, %s98
    %p102 = pneg %p96
    %p103 = scmp.eq.s32.totalorder %s10, 7
    %p104 = por %p102, %p103
    %p105 = scmp.ne.s32.totalorder %s97, %s100
    %p106 = scmp.eq.s32.totalorder %s10, 0
    %p107 = por %p105, %p106
    %p108 = scmp.ne.s32.totalorder %s97, %s100
    %p109 = scmp.eq.s32.totalorder %s15, 7
    %p110 = por %p108, %p109
    %p111 = scmp.ne.s32.totalorder %s100, %s101
    %p112 = scmp.eq.s32.totalorder %s15, 0
    %p113 = por %p111, %p112
    %p114 = scmp.ne.s32.totalorder %s100, %s101
    %p115 = scmp.eq.s32.totalorder %s16, 7
    %p116 = por %p114, %p115
    %p118 = scmp.ne.s32.totalorder %s101, %s117
    %p119 = scmp.eq.s32.totalorder %s16, 0
    %p120 = por %p118, %p119
    %s121 = ssub.s32 %s18, %s32
    %s122 = ssub.s32 %s19, %s28
    %s123 = sor.u32 %s121, %s122
    %p124 = scmp.eq.s32.totalorder %s123, 0
    %s126 = sadd.s32 %s125, 1
    %s127 = scalar_select %p124, %s125, %s126
    %p130 = pneg %p124
    %p131 = scmp.eq.s32.totalorder %s10, 7
    %p132 = por %p130, %p131
    %p133 = scmp.ne.s32.totalorder %s125, %s128
    %p134 = scmp.eq.s32.totalorder %s10, 0
    %p135 = por %p133, %p134
    %p136 = scmp.ne.s32.totalorder %s125, %s128
    %p137 = scmp.eq.s32.totalorder %s15, 7
    %p138 = por %p136, %p137
    %p139 = scmp.ne.s32.totalorder %s128, %s129
    %p140 = scmp.eq.s32.totalorder %s15, 0
    %p141 = por %p139, %p140
    %p142 = scmp.ne.s32.totalorder %s128, %s129
    %p143 = scmp.eq.s32.totalorder %s16, 7
    %p144 = por %p142, %p143
    %p146 = scmp.ne.s32.totalorder %s129, %s145
    %p147 = scmp.eq.s32.totalorder %s16, 0
    %p148 = por %p146, %p147
    %s149 = ssub.s32 %s17, %s36
    %s150 = ssub.s32 %s18, %s32
    %s151 = sor.u32 %s149, %s150
    %p152 = scmp.eq.s32.totalorder %s151, 0
    %s154 = sadd.s32 %s153, 1
    %s155 = scalar_select %p152, %s153, %s154
    %p158 = pneg %p152
    %p159 = scmp.eq.s32.totalorder %s10, 7
    %p160 = por %p158, %p159
    %p161 = scmp.ne.s32.totalorder %s153, %s156
    %p162 = scmp.eq.s32.totalorder %s10, 0
    %p163 = por %p161, %p162
    %p164 = scmp.ne.s32.totalorder %s153, %s156
    %p165 = scmp.eq.s32.totalorder %s15, 7
    %p166 = por %p164, %p165
    %p167 = scmp.ne.s32.totalorder %s156, %s157
    %p168 = scmp.eq.s32.totalorder %s15, 0
    %p169 = por %p167, %p168
    %p170 = scmp.ne.s32.totalorder %s156, %s157
    %p171 = scmp.eq.s32.totalorder %s16, 7
    %p172 = por %p170, %p171
    %p174 = scmp.ne.s32.totalorder %s157, %s173
    %p175 = scmp.eq.s32.totalorder %s16, 0
    %p176 = por %p174, %p175
    %p177 = scmp.le.s32.totalorder 1, %s10
    %p178 = scmp.lt.s32.totalorder %s10, 9
    %p179 = pnand %p177, %p178
    %p180 = pneg %p179
    // Predicated region
    $region9: #{prefill_attention.4} parent=5 // pred_check
      _
    $region10: #{prefill_attention.4} parent=5 // pred_check_branch
      %182 = sbr.rel (%p179) target = $region12
    $region11: #{prefill_attention.4} parent=5 // pred_region
      %s183 = ssub.s32 %s10, 1
      // Predicated region
      $region13: #{prefill_attention.4} parent=11 // pred_check
        %p184 = pneg %p141
      $region14: #{prefill_attention.4} parent=11 // pred_check_branch
        %186 = sbr.rel (%p184) target = $region16
      $region15: #{prefill_attention.4} parent=11 // pred_region
        %p187 = scmp.lt.s32.totalorder %s21, 0
        %s188 = scalar_select %p187, %s21, 0
        %p189 = scmp.lt.s32.totalorder %s22, 0
        %s190 = scalar_select %p189, %s22, 0
        %s191 = sadd.s32 %s190, %s188
        %s192 = smul.addr %s191, 8
        %s193 = scalar_lea.vmem %s3, %s192
      $region16: #{prefill_attention.4} parent=11 // pred_fallthru
        _
    $region12: #{prefill_attention.4} parent=5 // pred_fallthru
      _
    %p194 = scmp.lt.s32.totalorder %s10, 8
    // Predicated region
    $region17: #{prefill_attention.4} parent=5 // pred_check
      %p195 = pneg %p194
    $region18: #{prefill_attention.4} parent=5 // pred_check_branch
      %197 = sbr.rel (%p195) target = $region20
    $region19: #{prefill_attention.4} parent=5 // pred_region
      // Predicated region
      $region21: #{prefill_attention.4} parent=19 // pred_check
        %p198 = pneg %p51
      $region22: #{prefill_attention.4} parent=19 // pred_check_branch
        %200 = sbr.rel (%p198) target = $region24
      $region23: #{prefill_attention.4} parent=19 // pred_region
        %p201 = scmp.lt.s32.totalorder %s17, 7
        %s202 = scalar_select %p201, %s17, 7
        %p203 = scmp.lt.s32.totalorder %s18, 0
        %s204 = scalar_select %p203, %s18, 0
        %s205 = sadd.s32 %s204, %s202
        %s206 = smul.addr %s205, 8
        %s207 = scalar_lea.vmem %s0, %s206
      $region24: #{prefill_attention.4} parent=19 // pred_fallthru
        _
      // Predicated region
      $region25: #{prefill_attention.4} parent=19 // pred_check
        %p208 = pneg %p79
      $region26: #{prefill_attention.4} parent=19 // pred_check_branch
        %210 = sbr.rel (%p208) target = $region28
      $region27: #{prefill_attention.4} parent=19 // pred_region
        %p211 = scmp.lt.s32.totalorder %s17, 7
        %s212 = scalar_select %p211, %s17, 7
        %p213 = scmp.lt.s32.totalorder %s19, 0
        %s214 = scalar_select %p213, %s19, 0
        %s215 = sadd.s32 %s214, %s212
        %s216 = smul.addr %s215, 8
        %s217 = scalar_lea.vmem %s1, %s216
      $region28: #{prefill_attention.4} parent=19 // pred_fallthru
        _
      // Predicated region
      $region29: #{prefill_attention.4} parent=19 // pred_check
        %p218 = pneg %p107
      $region30: #{prefill_attention.4} parent=19 // pred_check_branch
        %220 = sbr.rel (%p218) target = $region32
      $region31: #{prefill_attention.4} parent=19 // pred_region
        %p221 = scmp.lt.s32.totalorder %s17, 7
        %s222 = scalar_select %p221, %s17, 7
        %p223 = scmp.lt.s32.totalorder %s19, 0
        %s224 = scalar_select %p223, %s19, 0
        %s225 = sadd.s32 %s224, %s222
        %s226 = smul.addr %s225, 8
        %s227 = scalar_lea.vmem %s2, %s226
      $region32: #{prefill_attention.4} parent=19 // pred_fallthru
        _
    $region20: #{prefill_attention.4} parent=5 // pred_fallthru
      _
    %p228 = scmp.le.s32.totalorder 1, %s10
    %p229 = scmp.lt.s32.totalorder %s10, 9
    %p230 = pnand %p228, %p229
    %p231 = pneg %p230
    // Predicated region
    $region33: #{prefill_attention.4} parent=5 // pred_check
      _
    $region34: #{prefill_attention.4} parent=5 // pred_check_branch
      %233 = sbr.rel (%p230) target = $region36
    $region35: #{prefill_attention.4} parent=5 // pred_region
      %s234 = ssub.s32 %s10, 1
      %p235 = scmp.lt.s32.totalorder %s20, 7
      %s236 = scalar_select %p235, %s20, 7
      %p237 = scmp.lt.s32.totalorder %s21, 0
      %s238 = scalar_select %p237, %s21, 0
      %s239 = sadd.s32 %s238, %s236
      %s240 = smul.addr %s239, 8
      %s241 = scalar_lea.vmem %s0, %s240
      %p242 = pneg %p57
      %p243 = pneg %p54
      %p244 = scmp.lt.s32.totalorder %s20, 7
      %s245 = scalar_select %p244, %s20, 7
      %p246 = scmp.lt.s32.totalorder %s22, 0
      %s247 = scalar_select %p246, %s22, 0
      %s248 = sadd.s32 %s247, %s245
      %s249 = smul.addr %s248, 8
      %s250 = scalar_lea.vmem %s1, %s249
      %p251 = pneg %p85
      %p252 = pneg %p82
      %p253 = scmp.lt.s32.totalorder %s20, 7
      %s254 = scalar_select %p253, %s20, 7
      %p255 = scmp.lt.s32.totalorder %s22, 0
      %s256 = scalar_select %p255, %s22, 0
      %s257 = sadd.s32 %s256, %s254
      %s258 = smul.addr %s257, 8
      %s259 = scalar_lea.vmem %s2, %s258
      %p260 = pneg %p113
      %p261 = pneg %p110
      %p262 = scmp.lt.s32.totalorder %s21, 0
      %s263 = scalar_select %p262, %s21, 0
      %p264 = scmp.lt.s32.totalorder %s22, 0
      %s265 = scalar_select %p264, %s22, 0
      %s266 = sadd.s32 %s265, %s263
      %s267 = smul.addr %s266, 8
      %s268 = scalar_lea.vmem %s3, %s267
      %p269 = pneg %p141
      %p270 = pneg %p138
      %p271 = pneg %p169
      %p272 = pneg %p166
      %p273 = scmp.lt.s32.totalorder %s20, 7
      %s274 = scalar_select %p273, %s20, 7
      %p275 = scmp.lt.s32.totalorder %s21, 0
      %s276 = scalar_select %p275, %s21, 0
      %s277 = sadd.s32 %s276, %s274
      %s278 = smul.addr %s277, 8
      %s279 = scalar_lea.vmem %s4, %s278
      %p280 = scmp.lt.s32.totalorder %s20, 7
      %s281 = scalar_select %p280, %s20, 7
      %p282 = scmp.lt.s32.totalorder %s21, 0
      %s283 = scalar_select %p282, %s21, 0
      %s284 = sadd.s32 %s283, %s281
      %s285 = smul.addr %s284, 8
      %s286 = scalar_lea.vmem %s0, %s285
      %p287 = scmp.lt.s32.totalorder %s20, 7
      %s288 = scalar_select %p287, %s20, 7
      %p289 = scmp.lt.s32.totalorder %s22, 0
      %s290 = scalar_select %p289, %s22, 0
      %s291 = sadd.s32 %s290, %s288
      %s292 = smul.addr %s291, 8
      %s293 = scalar_lea.vmem %s1, %s292
      %p294 = scmp.lt.s32.totalorder %s20, 7
      %s295 = scalar_select %p294, %s20, 7
      %p296 = scmp.lt.s32.totalorder %s22, 0
      %s297 = scalar_select %p296, %s22, 0
      %s298 = sadd.s32 %s297, %s295
      %s299 = smul.addr %s298, 8
      %s300 = scalar_lea.vmem %s2, %s299
      %p301 = scmp.lt.s32.totalorder %s21, 0
      %s302 = scalar_select %p301, %s21, 0
      %p303 = scmp.lt.s32.totalorder %s22, 0
      %s304 = scalar_select %p303, %s22, 0
      %s305 = sadd.s32 %s304, %s302
      %s306 = smul.addr %s305, 8
      %s307 = scalar_lea.vmem %s3, %s306
      %p308 = scmp.lt.s32.totalorder %s20, 7
      %s309 = scalar_select %p308, %s20, 7
      %p310 = scmp.lt.s32.totalorder %s21, 0
      %s311 = scalar_select %p310, %s21, 0
      %s312 = sadd.s32 %s311, %s309
      %s313 = smul.addr %s312, 8
      %s314 = scalar_lea.vmem %s4, %s313
      %p315 = scmp.eq.s32.totalorder %s22, 0
      // Predicated region
      $region37: #{prefill_attention.4} parent=35 // pred_check
        %p316 = pneg %p315
      $region38: #{prefill_attention.4} parent=35 // pred_check_branch
        %318 = sbr.rel (%p316) target = $region40
      $region39: #{prefill_attention.4} parent=35 // pred_region
        %vm319 = vcmask 7168
        %320 = vst.msk [vmem:[#allocation2] sm:$0xff] %vm319, -inf
        %321 = vst.msk [vmem:[#allocation3] sm:$0xff] %vm319, 0.0
        %vm322 = vcmask 64512
        %323 = vst.msk [vmem:[#allocation4] sm:$0xff] %vm322, 0.0
      $region40: #{prefill_attention.4} parent=35 // pred_fallthru
        _
      %v324 = vld [vmem:[%s286] sm:$0xff]
      %v325 = vld [vmem:[%s293] sm:$0xff]
      %v326 = vld [vmem:[%s300] sm:$0xff]
      %v327 = vld [vmem:[%s307] sm:$0xff]
      %vm328 = vcmask 64512
      %v330 = vsel %vm328, %v324, 0
      %v333 = vsel %vm328, %v325, 0
      %335 = vmatprep.subr.mxu0 0.0
      %336 = vmatpush1.xpose.msra.mxu0 0.0
      %337 = vmatprep.subr.mxu0 0.0
      %338 = vmatpush1.xpose.msra.mxu0 0.0
      %339 = vmatprep.subr.mxu0 0.0
      %340 = vmatpush1.xpose.msra.mxu0 0.0
      %341 = vmatprep.subr.mxu0 0.0
      %342 = vmatpush1.xpose.msra.mxu0 0.0
      %343 = vmatprep.subr.mxu0 0.0
      %344 = vmatpush1.xpose.msra.mxu0 0.0
      %345 = vmatprep.subr.mxu0 0.0
      %346 = vmatpush1.xpose.msra.mxu0 0.0
      %347 = vmatprep.subr.mxu0 0.0
      %348 = vmatpush1.xpose.msra.mxu0 0.0
      %349 = vmatprep.subr.mxu0 0.0
      %350 = vmatpush1.xpose.msra.mxu0 0.0
      %351 = vmatprep.subr.mxu0 0.0
      %352 = vmatpush1.xpose.msra.mxu0 0.0
      %353 = vmatprep.subr.mxu0 0.0
      %354 = vmatpush1.xpose.msra.mxu0 0.0
      %355 = vmatprep.subr.mxu0 0.0
      %356 = vmatpush1.xpose.msra.mxu0 0.0
      %357 = vmatprep.subr.mxu0 0.0
      %358 = vmatpush1.xpose.msra.mxu0 0.0
      %359 = vmatprep.subr.mxu0 0.0
      %360 = vmatpush1.xpose.msra.mxu0 0.0
      %361 = vmatprep.subr.mxu0 0.0
      %362 = vmatpush1.xpose.msra.mxu0 0.0
      %363 = vmatprep.subr.mxu0 0.0
      %364 = vmatpush1.xpose.msra.mxu0 0.0
      %365 = vmatprep.subr.mxu0 0.0
      %366 = vmatpush1.xpose.msra.mxu0 %v333
      %367 = vmatprep.subr.mxu0 0.0
      %368 = vmatpush2.xpose.msra.mxu0 0.0
      %369 = vmatprep.subr.mxu0 0.0
      %370 = vmatpush2.xpose.msra.mxu0 0.0
      %371 = vmatprep.subr.mxu0 0.0
      %372 = vmatpush2.xpose.msra.mxu0 0.0
      %373 = vmatprep.subr.mxu0 0.0
      %374 = vmatpush2.xpose.msra.mxu0 0.0
      %375 = vmatprep.subr.mxu0 0.0
      %376 = vmatpush2.xpose.msra.mxu0 0.0
      %377 = vmatprep.subr.mxu0 0.0
      %378 = vmatpush2.xpose.msra.mxu0 0.0
      %379 = vmatprep.subr.mxu0 0.0
      %380 = vmatpush2.xpose.msra.mxu0 0.0
      %381 = vmatprep.subr.mxu0 0.0
      %382 = vmatpush2.xpose.msra.mxu0 0.0
      %383 = vmatprep.subr.mxu0 0.0
      %384 = vmatpush2.xpose.msra.mxu0 0.0
      %385 = vmatprep.subr.mxu0 0.0
      %386 = vmatpush2.xpose.msra.mxu0 0.0
      %387 = vmatprep.subr.mxu0 0.0
      %388 = vmatpush2.xpose.msra.mxu0 0.0
      %389 = vmatprep.subr.mxu0 0.0
      %390 = vmatpush2.xpose.msra.mxu0 0.0
      %391 = vmatprep.subr.mxu0 0.0
      %392 = vmatpush2.xpose.msra.mxu0 0.0
      %393 = vmatprep.subr.mxu0 0.0
      %394 = vmatpush2.xpose.msra.mxu0 0.0
      %395 = vmatprep.subr.mxu0 0.0
      %396 = vmatpush2.xpose.msra.mxu0 0.0
      %397 = vmatprep.subr.mxu0 0.0
      %398 = vmatpush2.xpose.msra.mxu0 0.0
      %399 = vmatprep.mubr.f32.mxu0 0.0
      %400 = vmatmul.mubr.f32.gmra.mxu0 %v330
      %v401 = vpop.f32.mrf.mxu0
      %v402 = vadd.f32 %v327, %v401
      %v403 = vpop.f32.mrf.mxu0
      %404 = vdwg.mxu0
      %v405 = vld [vmem:[#allocation2] sm:$0xff]
      %v406 = vsel %vm328, %v402, -inf
      %407 = vmax.xlane.f32.xlu0 %v406
      %v408 = vpop.xlane.xlu0 %407
      %v409 = vmax.f32 %v405, %v408
      %v410 = vsub.f32 %v405, %v409
      %v411 = vmul.f32 %v410, 1.442695
      %v412 = vpow.pop %v411
      %414 = vset.pattern.permute.xlu0 0
      %415 = vperm.xlu0 %414, %v409
      %v416 = vpop.permute.xlu0 %415
      %v418 = vsub.f32 %v402, %v416
      %v419 = vmul.f32 %v418, 1.442695
      %v420 = vpow.pop %v419
      %v421 = vld [vmem:[#allocation3] sm:$0xff]
      %v422 = vmul.f32 %v412, %v421
      %v423 = vsel %vm328, %v420, 0.0
      %424 = vadd.xlane.f32.xlu0 %v423
      %v425 = vpop.xlane.xlu0 %424
      %v426 = vadd.f32 %v422, %v425
      %vm427 = vcmask 7168
      %428 = vst.msk [vmem:[#allocation3] sm:$0xff] %vm427, %v426
      %v429 = vld [vmem:[#allocation4] sm:$0xff]
      %431 = vset.pattern.permute.xlu0 0
      %432 = vperm.xlu0 %431, %v412
      %v433 = vpop.permute.xlu0 %432
      %v435 = vmul.f32 %v433, %v429
      %v437 = vsel %vm328, %v420, 0
      %439 = vmatprep.subr.mxu0 0.0
      %440 = vmatpush1.msra.mxu0 0.0
      %441 = vmatprep.subr.mxu0 0.0
      %442 = vmatpush1.msra.mxu0 0.0
      %443 = vmatprep.subr.mxu0 0.0
      %444 = vmatpush1.msra.mxu0 0.0
      %445 = vmatprep.subr.mxu0 0.0
      %446 = vmatpush1.msra.mxu0 0.0
      %447 = vmatprep.subr.mxu0 0.0
      %448 = vmatpush1.msra.mxu0 0.0
      %449 = vmatprep.subr.mxu0 0.0
      %450 = vmatpush1.msra.mxu0 0.0
      %451 = vmatprep.subr.mxu0 0.0
      %452 = vmatpush1.msra.mxu0 0.0
      %453 = vmatprep.subr.mxu0 0.0
      %454 = vmatpush1.msra.mxu0 0.0
      %455 = vmatprep.subr.mxu0 0.0
      %456 = vmatpush1.msra.mxu0 0.0
      %457 = vmatprep.subr.mxu0 0.0
      %458 = vmatpush1.msra.mxu0 0.0
      %459 = vmatprep.subr.mxu0 0.0
      %460 = vmatpush1.msra.mxu0 0.0
      %461 = vmatprep.subr.mxu0 0.0
      %462 = vmatpush1.msra.mxu0 0.0
      %463 = vmatprep.subr.mxu0 0.0
      %464 = vmatpush1.msra.mxu0 0.0
      %465 = vmatprep.subr.mxu0 0.0
      %466 = vmatpush1.msra.mxu0 0.0
      %467 = vmatprep.subr.mxu0 0.0
      %468 = vmatpush1.msra.mxu0 0.0
      %469 = vmatprep.subr.mxu0 0.0
      %470 = vmatpush1.msra.mxu0 %v326
      %471 = vmatprep.subr.mxu0 0.0
      %472 = vmatpush2.msra.mxu0 0.0
      %473 = vmatprep.subr.mxu0 0.0
      %474 = vmatpush2.msra.mxu0 0.0
      %475 = vmatprep.subr.mxu0 0.0
      %476 = vmatpush2.msra.mxu0 0.0
      %477 = vmatprep.subr.mxu0 0.0
      %478 = vmatpush2.msra.mxu0 0.0
      %479 = vmatprep.subr.mxu0 0.0
      %480 = vmatpush2.msra.mxu0 0.0
      %481 = vmatprep.subr.mxu0 0.0
      %482 = vmatpush2.msra.mxu0 0.0
      %483 = vmatprep.subr.mxu0 0.0
      %484 = vmatpush2.msra.mxu0 0.0
      %485 = vmatprep.subr.mxu0 0.0
      %486 = vmatpush2.msra.mxu0 0.0
      %487 = vmatprep.subr.mxu0 0.0
      %488 = vmatpush2.msra.mxu0 0.0
      %489 = vmatprep.subr.mxu0 0.0
      %490 = vmatpush2.msra.mxu0 0.0
      %491 = vmatprep.subr.mxu0 0.0
      %492 = vmatpush2.msra.mxu0 0.0
      %493 = vmatprep.subr.mxu0 0.0
      %494 = vmatpush2.msra.mxu0 0.0
      %495 = vmatprep.subr.mxu0 0.0
      %496 = vmatpush2.msra.mxu0 0.0
      %497 = vmatprep.subr.mxu0 0.0
      %498 = vmatpush2.msra.mxu0 0.0
      %499 = vmatprep.subr.mxu0 0.0
      %500 = vmatpush2.msra.mxu0 0.0
      %501 = vmatprep.subr.mxu0 0.0
      %502 = vmatpush2.msra.mxu0 0.0
      %503 = vmatprep.mubr.f32.mxu0 0.0
      %504 = vmatmul.mubr.f32.gmra.mxu0 %v437
      %v505 = vpop.f32.mrf.mxu0
      %v506 = vadd.f32 0.0, %v505
      %v507 = vpop.f32.mrf.mxu0
      %508 = vdwg.mxu0
      %v509 = vadd.f32 %v435, %v506
      %510 = vst.msk [vmem:[#allocation4] sm:$0xff] %vm328, %v509
      %511 = vst.msk [vmem:[#allocation2] sm:$0xff] %vm427, %v409
      // Predicated region
      $region41: #{prefill_attention.4} parent=35 // pred_check
        %p512 = pneg %p315
      $region42: #{prefill_attention.4} parent=35 // pred_check_branch
        %514 = sbr.rel (%p512) target = $region44
      $region43: #{prefill_attention.4} parent=35 // pred_region
        %v515 = vld [vmem:[#allocation4] sm:$0xff]
        %v516 = vld [vmem:[#allocation3] sm:$0xff]
        %v517 = vrcp.pop %v516
        %519 = vset.pattern.permute.xlu0 0
        %520 = vperm.xlu0 %519, %v517
        %v521 = vpop.permute.xlu0 %520
        %v523 = vmul.f32 %v515, %v521
        %524 = vst.msk [vmem:[%s314] sm:$0xff] %vm328, %v523
      $region44: #{prefill_attention.4} parent=35 // pred_fallthru
        _
      %p525 = scmp.lt.s32.totalorder %s20, 7
      %s526 = scalar_select %p525, %s20, 7
      %p527 = scmp.lt.s32.totalorder %s21, 0
      %s528 = scalar_select %p527, %s21, 0
      %s529 = sadd.s32 %s528, %s526
      %s530 = smul.addr %s529, 8
      %s531 = scalar_lea.vmem %s4, %s530
      // Predicated region
      $region45: #{prefill_attention.4} parent=35 // pred_check
        %p532 = pneg %p166
      $region46: #{prefill_attention.4} parent=35 // pred_check_branch
        %534 = sbr.rel (%p532) target = $region48
      $region47: #{prefill_attention.4} parent=35 // pred_region
        _
      $region48: #{prefill_attention.4} parent=35 // pred_fallthru
        _
    $region36: #{prefill_attention.4} parent=5 // pred_fallthru
      _
    %p535 = scmp.le.s32.totalorder 2, %s10
    // Predicated region
    $region49: #{prefill_attention.4} parent=5 // pred_check
      %p536 = pneg %p535
    $region50: #{prefill_attention.4} parent=5 // pred_check_branch
      %538 = sbr.rel (%p536) target = $region52
    $region51: #{prefill_attention.4} parent=5 // pred_region
      %s539 = ssub.s32 %s10, 2
      // Predicated region
      $region53: #{prefill_attention.4} parent=51 // pred_check
        %p540 = pneg %p172
      $region54: #{prefill_attention.4} parent=51 // pred_check_branch
        %542 = sbr.rel (%p540) target = $region56
      $region55: #{prefill_attention.4} parent=51 // pred_region
        %p543 = scmp.lt.s32.totalorder %s23, 7
        %s544 = scalar_select %p543, %s23, 7
        %p545 = scmp.lt.s32.totalorder %s24, 0
        %s546 = scalar_select %p545, %s24, 0
        %s547 = sadd.s32 %s546, %s544
        %s548 = smul.addr %s547, 8
        %s549 = scalar_lea.vmem %s4, %s548
      $region56: #{prefill_attention.4} parent=51 // pred_fallthru
        _
    $region52: #{prefill_attention.4} parent=5 // pred_fallthru
      _
  $region6: #{prefill_attention.4} parent=0 // loop_footer
    %s14 = sadd.s32 1, %s10
  $region7: #{prefill_attention.4} parent=0 // loop_footer_branch
    %9 = sbr.rel target = $region3
  $region8: #{prefill_attention.4} parent=0 // loop_exit
    _

</llo_original>
